<compile_context>
chip_gen: v7x
topology: tpu7x:2x2x1
jax: 0.10.0
libtpu: 0.0.40
codegen_flags: <defaults>
</compile_context>

<pallas_src>
import functools

import jax
import jax.numpy as jnp
from jax.experimental import pallas as pl
from jax.experimental.pallas import tpu as pltpu


def _kl_sim_loss_kernel(emb_ref, out_ref, *, scale):
    """KL(student_logp || teacher_logp) with batchmean reduction.

    emb_ref : [4, B, D] stacked as [anchor_s, anchor_t, pos_s, pos_t].
    out_ref : [1, 1] scalar loss in SMEM.
    """
    B = emb_ref.shape[1]
    D = emb_ref.shape[2]

    emb = emb_ref[...].astype(jnp.float32)                              # [4, B, D]
    # Cosine-similarity row normalization (kept in f32).
    inv_norm = jax.lax.rsqrt(
        jnp.maximum(jnp.sum(emb * emb, axis=-1, keepdims=True), 1e-24))
    emb_n = emb * inv_norm

    # Fuse student + teacher into a single MXU push:
    #   anchors   = [a_s ; a_t] -> [2B, D],  positives = [p_s ; p_t] -> [2B, D]
    # bf16 inputs + f32 accumulation = native single-pass MXU format.
    anchors = emb_n[0:2].reshape(2 * B, D).astype(jnp.bfloat16)
    positives = emb_n[2:4].reshape(2 * B, D).astype(jnp.bfloat16)

    # Transposed-RHS contraction: contract last dim of both operands
    # (no explicit p_n.T materialization through the XLU).
    sims_full = scale * jax.lax.dot_general(
        anchors, positives,
        dimension_numbers=(((1,), (1,)), ((), ())),
        preferred_element_type=jnp.float32)                             # [2B, 2B]

    s_sims = sims_full[:B, :B]    # student anchors vs student positives
    t_sims = sims_full[B:, B:]    # teacher anchors vs teacher positives

    def log_softmax(sims):
        m = jnp.max(sims, axis=-1, keepdims=True)
        e = jnp.exp(sims - m)
        ssum = jnp.sum(e, axis=-1, keepdims=True)
        return sims - m - jnp.log(ssum), e, ssum

    s_logp, _, _ = log_softmax(s_sims)                                  # [B, B]
    t_logp, t_e, t_sum = log_softmax(t_sims)                            # [B, B]

    # Reuse teacher exp(sims - m); EUP approximate reciprocal instead of divide.
    t_probs = t_e * pl.reciprocal(t_sum, approx=True)                   # [B, B]

    # KLDivLoss(log_target=True): exp(t) * (t - s); 'batchmean' -> sum / B.
    # Hierarchical reduce: lane (candidate) axis first, then the [B,1] column.
    kl_rows = jnp.sum(t_probs * (t_logp - s_logp), axis=-1, keepdims=True)
    kl = jnp.sum(kl_rows)
    out_ref[0, 0] = kl / jnp.float32(B)


def kl_similarity_loss(anchor_s, pos_s, anchor_t, pos_t, scale=20.0):
    """Pallas wrapper. All four embedding matrices are [B, D]."""
    B, D = anchor_s.shape
    # One [4, B, D] slab -> a single DMA and a single (non-double-buffered)
    # VMEM input buffer; no grid since everything fits one invocation.
    emb = jnp.stack([anchor_s, anchor_t, pos_s, pos_t], axis=0)
    kernel = functools.partial(_kl_sim_loss_kernel, scale=float(scale))
    out = pl.pallas_call(
        kernel,
        out_shape=jax.ShapeDtypeStruct((1, 1), jnp.float32),
        in_specs=[pl.BlockSpec(memory_space=pltpu.MemorySpace.VMEM)],
        out_specs=pl.BlockSpec(memory_space=pltpu.MemorySpace.SMEM),
    )(emb)
    return out[0, 0]


if __name__ == "__main__":
    key = jax.random.PRNGKey(0)
    B, L, H, D = 8, 16, 64, 128   # batch, seq, token-hidden, sentence-embedding dim
    SCALE = 20.0

    k1, k2, k3, k4 = jax.random.split(key, 4)
    # "sentence_features": (anchor, positive) pairs of token features.
    anchor_tokens = jax.random.normal(k1, (B, L, H), dtype=jnp.float32)
    positive_tokens = jax.random.normal(k2, (B, L, H), dtype=jnp.float32)

    # Deterministic synthetic encoder parameters (student and teacher differ).
    W_student = jax.random.normal(k3, (H, D), dtype=jnp.float32) / jnp.sqrt(H)
    W_teacher = jax.random.normal(k4, (H, D), dtype=jnp.float32) / jnp.sqrt(H)

    def encode(tokens, W):
        # plain-JAX glue standing in for model(sentence_feature)['sentence_embedding']
        return jnp.mean(tokens, axis=1) @ W   # [B, D]

    @jax.jit
    def full_loss(a_tok, p_tok, W_s, W_t):
        # Encoder stub jit-fused adjacent to the pallas_call so the [B, D]
        # embeddings don't round-trip HBM as separate dispatches.
        a_s = encode(a_tok, W_s)
        p_s = encode(p_tok, W_s)
        a_t = encode(a_tok, W_t)
        p_t = encode(p_tok, W_t)
        return kl_similarity_loss(a_s, p_s, a_t, p_t, scale=SCALE)

    loss = jax.block_until_ready(
        full_loss(anchor_tokens, positive_tokens, W_student, W_teacher))

    # Pure-JAX reference (mirrors the bf16 matmul quantization) for sanity.
    a_s = encode(anchor_tokens, W_student)
    p_s = encode(positive_tokens, W_student)
    a_t = encode(anchor_tokens, W_teacher)
    p_t = encode(positive_tokens, W_teacher)

    def ref_logp(a, p):
        a_n = (a / jnp.linalg.norm(a, axis=-1, keepdims=True)).astype(jnp.bfloat16)
        p_n = (p / jnp.linalg.norm(p, axis=-1, keepdims=True)).astype(jnp.bfloat16)
        sims = SCALE * jnp.dot(a_n, p_n.T, preferred_element_type=jnp.float32)
        return jax.nn.log_softmax(sims.astype(jnp.float32), axis=1)

    s_lp = ref_logp(a_s, p_s)
    t_lp = ref_logp(a_t, p_t)
    ref = jnp.sum(jnp.exp(t_lp) * (t_lp - s_lp)) / B
    assert jnp.allclose(loss, ref, rtol=1e-2, atol=1e-2), (loss, ref)

    print("KERNEL_OK")
</pallas_src>

<mosaic_0001>
module attributes {stable_mosaic.version = 11 : i64} {
  func.func @_kl_sim_loss_kernel(%arg0: memref<4x8x128xf32, #tpu.memory_space<vmem>>, %arg1: memref<1x1xf32, #tpu.memory_space<smem>>) attributes {dimension_semantics = [], scalar_prefetch = 0 : i64, scratch_operands = 0 : i64, tpu.core_type = #tpu.core_type<tc>} {
    %c0 = arith.constant 0 : index
    %c0_0 = arith.constant 0 : index
    %c0_1 = arith.constant 0 : index
    %0 = vector.load %arg0[%c0, %c0_0, %c0_1] : memref<4x8x128xf32, #tpu.memory_space<vmem>>, vector<4x8x128xf32>
    %1 = arith.mulf %0, %0 : vector<4x8x128xf32>
    %cst = arith.constant dense<0.000000e+00> : vector<4x8xf32>
    %2 = vector.multi_reduction <add>, %1, %cst [2] : vector<4x8x128xf32> to vector<4x8xf32>
    %3 = vector.shape_cast %2 : vector<4x8xf32> to vector<4x8x1xf32>
    %cst_2 = arith.constant 1.000000e-24 : f32
    %4 = vector.broadcast %cst_2 : f32 to vector<4x8x1xf32>
    %5 = arith.maximumf %3, %4 : vector<4x8x1xf32>
    %6 = math.rsqrt %5 : vector<4x8x1xf32>
    %7 = vector.broadcast %6 : vector<4x8x1xf32> to vector<4x8x128xf32>
    %8 = arith.mulf %0, %7 : vector<4x8x128xf32>
    %9 = vector.extract_strided_slice %8 {offsets = [0, 0, 0], sizes = [2, 8, 128], strides = [1, 1, 1]} : vector<4x8x128xf32> to vector<2x8x128xf32>
    %10 = vector.shape_cast %9 : vector<2x8x128xf32> to vector<16x128xf32>
    %11 = arith.truncf %10 : vector<16x128xf32> to vector<16x128xbf16>
    %12 = vector.extract_strided_slice %8 {offsets = [2, 0, 0], sizes = [2, 8, 128], strides = [1, 1, 1]} : vector<4x8x128xf32> to vector<2x8x128xf32>
    %13 = vector.shape_cast %12 : vector<2x8x128xf32> to vector<16x128xf32>
    %14 = arith.truncf %13 : vector<16x128xf32> to vector<16x128xbf16>
    %cst_3 = arith.constant dense<0.000000e+00> : vector<16x16xf32>
    %15 = tpu.matmul %11, %14, %cst_3 {dimension_numbers = #tpu.dot_dimension_numbers<[1], [1], [0], [0], [0, 0, 1, 0], [], []>} : vector<16x128xbf16>, vector<16x128xbf16>, vector<16x16xf32> -> vector<16x16xf32>
    %cst_4 = arith.constant 2.000000e+01 : f32
    %16 = vector.broadcast %cst_4 : f32 to vector<16x16xf32>
    %17 = arith.mulf %16, %15 : vector<16x16xf32>
    %18 = vector.extract_strided_slice %17 {offsets = [0, 0], sizes = [8, 8], strides = [1, 1]} : vector<16x16xf32> to vector<8x8xf32>
    %19 = vector.extract_strided_slice %17 {offsets = [8, 8], sizes = [8, 8], strides = [1, 1]} : vector<16x16xf32> to vector<8x8xf32>
    %cst_5 = arith.constant dense<0xFF800000> : vector<8xf32>
    %20 = vector.multi_reduction <maximumf>, %18, %cst_5 [1] : vector<8x8xf32> to vector<8xf32>
    %21 = vector.shape_cast %20 : vector<8xf32> to vector<8x1xf32>
    %22 = vector.broadcast %21 : vector<8x1xf32> to vector<8x8xf32>
    %23 = arith.subf %18, %22 : vector<8x8xf32>
    %24 = math.exp %23 : vector<8x8xf32>
    %cst_6 = arith.constant dense<0.000000e+00> : vector<8xf32>
    %25 = vector.multi_reduction <add>, %24, %cst_6 [1] : vector<8x8xf32> to vector<8xf32>
    %26 = vector.shape_cast %25 : vector<8xf32> to vector<8x1xf32>
    %27 = vector.broadcast %21 : vector<8x1xf32> to vector<8x8xf32>
    %28 = arith.subf %18, %27 : vector<8x8xf32>
    %29 = math.log %26 : vector<8x1xf32>
    %30 = vector.broadcast %29 : vector<8x1xf32> to vector<8x8xf32>
    %31 = arith.subf %28, %30 : vector<8x8xf32>
    %cst_7 = arith.constant dense<0xFF800000> : vector<8xf32>
    %32 = vector.multi_reduction <maximumf>, %19, %cst_7 [1] : vector<8x8xf32> to vector<8xf32>
    %33 = vector.shape_cast %32 : vector<8xf32> to vector<8x1xf32>
    %34 = vector.broadcast %33 : vector<8x1xf32> to vector<8x8xf32>
    %35 = arith.subf %19, %34 : vector<8x8xf32>
    %36 = math.exp %35 : vector<8x8xf32>
    %cst_8 = arith.constant dense<0.000000e+00> : vector<8xf32>
    %37 = vector.multi_reduction <add>, %36, %cst_8 [1] : vector<8x8xf32> to vector<8xf32>
    %38 = vector.shape_cast %37 : vector<8xf32> to vector<8x1xf32>
    %39 = vector.broadcast %33 : vector<8x1xf32> to vector<8x8xf32>
    %40 = arith.subf %19, %39 : vector<8x8xf32>
    %41 = math.log %38 : vector<8x1xf32>
    %42 = vector.broadcast %41 : vector<8x1xf32> to vector<8x8xf32>
    %43 = arith.subf %40, %42 : vector<8x8xf32>
    %44 = tpu.reciprocal %38 {approx = true} : vector<8x1xf32> -> vector<8x1xf32>
    %45 = vector.broadcast %44 : vector<8x1xf32> to vector<8x8xf32>
    %46 = arith.mulf %36, %45 : vector<8x8xf32>
    %47 = arith.subf %43, %31 : vector<8x8xf32>
    %48 = arith.mulf %46, %47 : vector<8x8xf32>
    %cst_9 = arith.constant dense<0.000000e+00> : vector<8xf32>
    %49 = vector.multi_reduction <add>, %48, %cst_9 [1] : vector<8x8xf32> to vector<8xf32>
    %50 = vector.shape_cast %49 : vector<8xf32> to vector<8x1xf32>
    %51 = vector.shape_cast %50 : vector<8x1xf32> to vector<1x8x1xf32>
    %cst_10 = arith.constant dense<0.000000e+00> : vector<1xf32>
    %52 = vector.multi_reduction <add>, %51, %cst_10 [1, 2] : vector<1x8x1xf32> to vector<1xf32>
    %53 = vector.shape_cast %52 : vector<1xf32> to vector<1x1x1xf32>
    %54 = vector.extract %53[0, 0, 0] : f32 from vector<1x1x1xf32>
    %cst_11 = arith.constant 8.000000e+00 : f32
    %55 = arith.divf %54, %cst_11 : f32
    %c0_12 = arith.constant 0 : index
    %c0_13 = arith.constant 0 : index
    %56 = memref.load %arg1[%c0_12, %c0_13] : memref<1x1xf32, #tpu.memory_space<smem>>
    memref.store %55, %arg1[%c0_12, %c0_13] : memref<1x1xf32, #tpu.memory_space<smem>>
    return
  }
}

</mosaic_0001>

<llo_original>
// kernel: full_loss.1
$region0: #{full_loss.1}
  #allocation0 [shape = 'u32[]', space=smem, size = 0x4, offset = 0x4, fixed_abs, tag = 'smem constant byte address 0x4 - core index']
  #allocation1 [shape = 'u32[144,128]{1,0:T(1,128)}', space=vmem, size = 0x12000, scoped, tag = 'internal scratch']
  %s0 = inlined_call_operand.vmem [shape: f32[4,8,128], index: 0, kind: input, shape index: {}]
  %s1 = inlined_call_operand.hbm [shape: f32[1,1], index: 1, kind: output, shape index: {}]
  %s2 = sld [smem:[#allocation0]]
  $region14: #{full_loss.1} parent=0
    _
  %s4 = ssub.s32 1, %s2
  %s5 = scalar_select 0, %s4, %s2
  $region1: #{full_loss.1} parent=0
    #allocation2 [shape = 'u8[512]{0}', space=smem, size = 0x200, scoped, tag = 'output window, operand 0, single buffered']
    #allocation3 [shape = 's32[1]{0}', space=sflag, size = 0x4, scoped, tag = 'scoped memory for full_loss.1']
    %6 = vsyncpa [#allocation3], 0
    // Predicated region
    $region2: #{full_loss.1} parent=1 // pred_check
      _
    $region3: #{full_loss.1} parent=1 // pred_check_branch
      %8 = sbr.rel (0) target = $region5
    $region4: #{full_loss.1} parent=1 // pred_region
      _
    $region5: #{full_loss.1} parent=1 // pred_fallthru
      _
    %v10 = vld [vmem:[%s0] sm:$0xff]
    %v11 = vld [vmem:[%s0 + $0x8] sm:$0xff]
    %v12 = vld [vmem:[%s0 + $0x10] sm:$0xff]
    %v13 = vld [vmem:[%s0 + $0x18] sm:$0xff]
    %v14 = vmul.f32 %v10, %v10
    %v15 = vmul.f32 %v11, %v11
    %v16 = vmul.f32 %v12, %v12
    %v17 = vmul.f32 %v13, %v13
    %18 = vadd.xlane.f32.xlu0 %v14
    %v19 = vpop.xlane.xlu0 %18
    %20 = vadd.xlane.f32.xlu0 %v15
    %v21 = vpop.xlane.xlu0 %20
    %22 = vadd.xlane.f32.xlu0 %v16
    %v23 = vpop.xlane.xlu0 %22
    %24 = vadd.xlane.f32.xlu0 %v17
    %v25 = vpop.xlane.xlu0 %24
    %v26 = vmax.f32 %v19, 1e-24
    %v27 = vmax.f32 %v21, 1e-24
    %v28 = vmax.f32 %v23, 1e-24
    %v29 = vmax.f32 %v25, 1e-24
    %v30 = vrsqrt.pop %v26
    %v31 = vrsqrt.pop %v27
    %v32 = vrsqrt.pop %v28
    %v33 = vrsqrt.pop %v29
    %v34 = vmul.f32 %v10, %v30
    %v35 = vmul.f32 %v11, %v31
    %v36 = vmul.f32 %v12, %v32
    %v37 = vmul.f32 %v13, %v33
    %v38 = vpack.c.bf16 %v35, %v34
    %v39 = vpack.c.bf16 %v37, %v36
    %40 = vmatprep.subr.bf16.mxu0 0
    %41 = vmatpush1.bf16.xpose.msra.mxu0 %v39
    %42 = vmatprep.subr.bf16.mxu0 0
    %43 = vmatpush1.bf16.xpose.msra.mxu0 0
    %44 = vmatprep.subr.bf16.mxu0 0
    %45 = vmatpush1.bf16.xpose.msra.mxu0 0
    %46 = vmatprep.subr.bf16.mxu0 0
    %47 = vmatpush1.bf16.xpose.msra.mxu0 0
    %48 = vmatprep.subr.bf16.mxu0 0
    %49 = vmatpush1.bf16.xpose.msra.mxu0 0
    %50 = vmatprep.subr.bf16.mxu0 0
    %51 = vmatpush1.bf16.xpose.msra.mxu0 0
    %52 = vmatprep.subr.bf16.mxu0 0
    %53 = vmatpush1.bf16.xpose.msra.mxu0 0
    %54 = vmatprep.subr.bf16.mxu0 0
    %55 = vmatpush1.bf16.xpose.msra.mxu0 0
    %56 = vmatprep.subr.bf16.mxu0 0
    %57 = vmatpush1.bf16.xpose.msra.mxu0 0
    %58 = vmatprep.subr.bf16.mxu0 0
    %59 = vmatpush1.bf16.xpose.msra.mxu0 0
    %60 = vmatprep.subr.bf16.mxu0 0
    %61 = vmatpush1.bf16.xpose.msra.mxu0 0
    %62 = vmatprep.subr.bf16.mxu0 0
    %63 = vmatpush1.bf16.xpose.msra.mxu0 0
    %64 = vmatprep.subr.bf16.mxu0 0
    %65 = vmatpush1.bf16.xpose.msra.mxu0 0
    %66 = vmatprep.subr.bf16.mxu0 0
    %67 = vmatpush1.bf16.xpose.msra.mxu0 0
    %68 = vmatprep.subr.bf16.mxu0 0
    %69 = vmatpush1.bf16.xpose.msra.mxu0 0
    %70 = vmatprep.subr.bf16.mxu0 0
    %71 = vmatpush1.bf16.xpose.msra.mxu0 0
    %72 = vmatprep.mubr.bf16.mxu0 0
    %73 = vmatmul.mubr.bf16.gmra.mrb[0].mxu0 %v38
    %v74 = vpop.f32.mrb[0].mxu0
    %v75 = vadd.f32 0.0, %v74
    %v76 = vpop.f32.mrb[0].mxu0
    %v77 = vpop.f32.mrb[0].mxu0
    %v78 = vadd.f32 0.0, %v77
    %v79 = vpop.f32.mrb[0].mxu0
    %80 = vdwg.mxu0
    %v81 = vmul.f32 %v75, 20.0
    %v82 = vmul.f32 %v78, 20.0
    %vm83 = vcmask 64512
    %v84 = vsel %vm83, %v81, -inf
    %85 = vmax.xlane.f32.xlu0 %v84
    %v86 = vpop.xlane.xlu0 %85
    %v87 = vsub.f32 %v81, %v86
    %v88 = vmul.f32 %v87, 1.442695
    %v89 = vpow.pop %v88
    %v90 = vsel %vm83, %v89, 0.0
    %91 = vadd.xlane.f32.xlu0 %v90
    %v92 = vpop.xlane.xlu0 %91
    %v93 = vlog2.pop %v92
    %v94 = vmul.f32 %v93, 0.6931472
    %v95 = vsub.f32 %v87, %v94
    %vm96 = vcmask 130112
    %v97 = vsel %vm96, %v82, -inf
    %98 = vmax.xlane.f32.xlu0 %v97
    %v99 = vpop.xlane.xlu0 %98
    %v100 = vsub.f32 %v82, %v99
    %v101 = vmul.f32 %v100, 1.442695
    %v102 = vpow.pop %v101
    %104 = vrot.lane.b32.xlu0 %v102, 120
    %v105 = vpop.permute.xlu0 %104
    %v107 = vsel %vm83, %v105, 0.0
    %108 = vadd.xlane.f32.xlu0 %v107
    %v109 = vpop.xlane.xlu0 %108
    %v110 = vlog2.pop %v109
    %v111 = vmul.f32 %v110, 0.6931472
    %v112 = vsub.f32 %v100, %v111
    %v113 = vrcp.pop %v109
    %v114 = vmul.f32 %v102, %v113
    %116 = vrot.lane.b32.xlu0 %v95, 8
    %v117 = vpop.permute.xlu0 %116
    %v119 = vsub.f32 %v112, %v117
    %v120 = vmul.f32 %v114, %v119
    %122 = vrot.lane.b32.xlu0 %v120, 120
    %v123 = vpop.permute.xlu0 %122
    %v125 = vsel %vm83, %v123, 0.0
    %126 = vadd.xlane.f32.xlu0 %v125
    %v127 = vpop.xlane.xlu0 %126
    %vm128 = vcmask 7168
    %v129 = vsel %vm128, %v127, 0.0
    %130 = vadd.xlane.f32.xlu0 %v129
    %v131 = vpop.xlane.xlu0 %130
    %v132 = vrot.slane %v131, 4
    %v133 = vadd.f32 %v131, %v132
    %v134 = vrot.slane %v133, 2
    %v135 = vadd.f32 %v133, %v134
    %v136 = vrot.slane %v135, 1
    %v137 = vadd.f32 %v135, %v136
    %s138 = vtos %v137
    %v139 = vrcp.pop 8.0
    %s140 = vtos %v139
    %s141 = smul.f32 %s138, %s140
    %s142 = scalar_lea.smem [#allocation2], 0
    %143 = sst [smem:[%s142]] %s141
    // Predicated region
    $region6: #{full_loss.1} parent=1 // pred_check
      _
    $region7: #{full_loss.1} parent=1 // pred_check_branch
      %145 = sbr.rel (0) target = $region9
    $region8: #{full_loss.1} parent=1 // pred_region
      %s147 = ssub.s32 16, 16
      %148 = vsyncadd [#allocation3], %s147
      %151 = dma.smem_to_hbm [#allocation2], 16, %s1, [#allocation3]
    $region9: #{full_loss.1} parent=1 // pred_fallthru
      _
    // Predicated region
    $region10: #{full_loss.1} parent=1 // pred_check
      _
    $region11: #{full_loss.1} parent=1 // pred_check_branch
      %153 = sbr.rel (0) target = $region13
    $region12: #{full_loss.1} parent=1 // pred_region
      %154 = dma.done [#allocation3], 16
    $region13: #{full_loss.1} parent=1 // pred_fallthru
      _
    %155 = sfence
    %156 = vsyncpa [#allocation3], 1

</llo_original>
